<compile_context>
chip_gen: v7x
topology: tpu7x:2x2x1
jax: 0.10.0
libtpu: 0.0.40
codegen_flags: <defaults>
</compile_context>

<pallas_src>
import math

import numpy as np
import jax
import jax.numpy as jnp
from jax.experimental import pallas as pl
from jax.experimental.pallas import tpu as pltpu


# Cody-Waite constants for reducing the sin argument modulo 2*pi in f32.
# Accurate for |t * freq| up to ~1e4 (diffusion timesteps); add a second hi/lo split
# term if a much larger argument range is ever needed.
_TWO_PI_HI = 6.28125                      # exactly representable (few mantissa bits)
_TWO_PI_LO = 2.0 * math.pi - 6.28125      # ~1.9353072e-3
_INV_TWO_PI = 1.0 / (2.0 * math.pi)

_MAX_PACK = 8   # cap on rows packed per lane group (VPU cost is ~2*k ops per output vreg)


def _make_kernel(k_groups: int):
    """Builds the per-tile kernel.

    t_ref   : (TB, k)       f32  -- k packed timesteps per kernel row
    tab_ref : (k+1, k*dim)  f32  -- rows 0..k-1: per-group masked freqs, row k: phase
    out_ref : (TB, k*dim)   out dtype
    """

    def kernel(t_ref, tab_ref, out_ref):
        # x[r, g*dim + d] = t[r, g] * freq[d] + phase[d], built as
        # phase + sum_g t[:, g] * masked_freq[g].  Pure VPU broadcasts; the MXU is
        # deliberately NOT used (K is tiny, the store path is the bottleneck).
        x = t_ref[:, 0:1] * tab_ref[0:1, :] + tab_ref[k_groups:k_groups + 1, :]
        for g in range(1, k_groups):
            x = x + t_ref[:, g:g + 1] * tab_ref[g:g + 1, :]

        # Cody-Waite range reduction keeps in-kernel f32 sin accurate at diffusion-scale
        # timestep arguments (up to ~1e3-1e4).
        n = jnp.floor(x * _INV_TWO_PI + 0.5)
        r = (x - n * _TWO_PI_HI) - n * _TWO_PI_LO

        # Single full-width (lane-dense when (k*dim) % 128 == 0) store per tile.
        out_ref[...] = jnp.sin(r).astype(out_ref.dtype)

    return kernel


def _round_up(x: int, m: int) -> int:
    return -(-x // m) * m


def sinusoidal_position_embeddings(time: jax.Array, dim: int, *,
                                   out_dtype=jnp.float32) -> jax.Array:
    """time: (B,) timesteps. Returns (B, dim) embeddings [sin(t*f), cos(t*f)]."""
    assert dim % 2 == 0, "dim must be even"
    half_dim = dim // 2
    assert half_dim >= 2, "dim must be >= 4 (half_dim - 1 in denominator)"

    b = int(time.shape[0])

    # ---- lane packing factor: smallest k with (k*dim) % 128 == 0, capped at _MAX_PACK ----
    if dim % 128 == 0:
        k = 1
    else:
        k = 128 // math.gcd(dim, 128)
        if k > _MAX_PACK:
            k = 1          # awkward dims: fall back to (correct) masked partial stores
    dp = k * dim           # lane width of one packed kernel row

    # ---- constant tables (computed once by XLA in the wrapper, never in the kernel) ----
    scale = math.log(10000.0) / (half_dim - 1)
    freqs = jnp.exp(jnp.arange(half_dim, dtype=jnp.float32) * jnp.float32(-scale))
    freq_row = jnp.tile(jnp.concatenate([freqs, freqs]), (k,))                      # (dp,)
    phase_row = jnp.tile(
        jnp.concatenate([jnp.zeros((half_dim,), jnp.float32),
                         jnp.full((half_dim,), math.pi / 2.0, dtype=jnp.float32)]),
        (k,))                                                                        # (dp,)
    group = jnp.repeat(jnp.arange(k, dtype=jnp.int32), dim)                          # (dp,)
    masked_freqs = jnp.where(group[None, :] == jnp.arange(k, dtype=jnp.int32)[:, None],
                             freq_row[None, :], jnp.float32(0.0))                    # (k, dp)
    tab = jnp.concatenate([masked_freqs, phase_row[None, :]], axis=0)                # (k+1, dp)

    # ---- pack timesteps: (B,) -> (rows, k), padding B up to a multiple of k ----
    t = time.astype(jnp.float32)
    b_pad = _round_up(b, k)
    if b_pad != b:
        # Padded rows (and uninitialized rows of a partial last grid block) produce garbage
        # embeddings that are simply discarded -- nothing accumulates across rows, so this
        # is safe.  Do not change this if refactoring into a reducing kernel.
        t = jnp.concatenate([t, jnp.zeros((b_pad - b,), jnp.float32)])
    rows = b_pad // k
    t2d = t.reshape(rows, k)

    # ---- batch-tile sizing from a per-chip VMEM budget ----
    try:
        vmem_cap = int(pltpu.get_tpu_info().vmem_capacity_bytes)
        if vmem_cap <= 0:
            raise ValueError(vmem_cap)
    except Exception:
        vmem_cap = 64 << 20            # conservative default = v7x per-core VMEM
    out_bytes = np.dtype(out_dtype).itemsize
    budget = vmem_cap // 3             # headroom for the const table + compiler scratch
    # double-buffered output row + double-buffered, lane-padded (->128 lanes) f32 t row
    bytes_per_row = 2 * (dp * out_bytes + 128 * 4)
    cap_rows = max(8, (budget // bytes_per_row) // 8 * 8)

    if rows >= 16:
        # At least 2 grid steps so the "parallel" axis can shard across both v7x TCs.
        half_rows = _round_up(-(-rows // 2), 8)
        tb = min(cap_rows, half_rows)
    else:
        tb = rows                      # single block; block dim == full array dim is legal
    grid = (pl.cdiv(rows, tb),)

    tab_rows_pad = _round_up(k + 1, 8)
    needed = tb * bytes_per_row + 2 * tab_rows_pad * dp * 4 + (2 << 20)
    vmem_limit = int(min(vmem_cap - (2 << 20), max(needed, 32 << 20)))

    out_packed = pl.pallas_call(
        _make_kernel(k),
        out_shape=jax.ShapeDtypeStruct((rows, dp), out_dtype),
        grid=grid,
        in_specs=[
            pl.BlockSpec((tb, k), lambda i: (i, 0)),        # packed timesteps (tiny tile)
            pl.BlockSpec((k + 1, dp), lambda i: (0, 0)),    # grid-invariant constant table
        ],
        out_specs=pl.BlockSpec((tb, dp), lambda i: (i, 0)),
        compiler_params=pltpu.CompilerParams(
            dimension_semantics=("parallel",),
            vmem_limit_bytes=vmem_limit,
        ),
    )(t2d, tab)

    # Row-major unpack is free; a copy only materializes when B % k != 0 (slice).
    out = out_packed.reshape(b_pad, dim)
    return out[:b] if b_pad != b else out


def _reference(time, dim):
    """Pure-JAX mirror of the PyTorch module."""
    half_dim = dim // 2
    emb = math.log(10000.0) / (half_dim - 1)
    emb = jnp.exp(jnp.arange(half_dim, dtype=jnp.float32) * -emb)
    emb = time.astype(jnp.float32)[:, None] * emb[None, :]
    return jnp.concatenate([jnp.sin(emb), jnp.cos(emb)], axis=-1)


if __name__ == "__main__":
    key = jax.random.PRNGKey(0)

    # Primary case: typical diffusion timesteps (0..999), small shapes.
    batch, dim = 8, 32
    time = jax.random.randint(key, (batch,), minval=0, maxval=1000).astype(jnp.float32)
    out = jax.block_until_ready(sinusoidal_position_embeddings(time, dim))
    assert out.shape == (batch, dim), out.shape
    assert out.dtype == jnp.float32
    err = float(jnp.max(jnp.abs(out - _reference(time, dim))))
    # Tolerance covers fused-phase (cos == sin(x+pi/2)) + hardware sin rounding at args ~1e3.
    assert err < 2e-3, f"(8,32) mismatch vs reference: max_abs_err={err}"

    # Extra coverage: padded lane-packing (B % k != 0) and the already-lane-dense
    # dim % 128 == 0 path with a multi-step grid / partial last block.
    for batch2, dim2 in ((10, 32), (50, 128)):
        t2 = jax.random.randint(jax.random.PRNGKey(1), (batch2,), 0, 1000).astype(jnp.float32)
        o2 = jax.block_until_ready(sinusoidal_position_embeddings(t2, dim2))
        e2 = float(jnp.max(jnp.abs(o2 - _reference(t2, dim2))))
        assert o2.shape == (batch2, dim2), o2.shape
        assert e2 < 2e-3, f"({batch2},{dim2}) mismatch vs reference: max_abs_err={e2}"

    print("KERNEL_OK")
</pallas_src>

<mosaic_0001>
module attributes {stable_mosaic.version = 11 : i64} {
  func.func @kernel(%arg0: i32, %arg1: memref<2x4xf32, #tpu.memory_space<vmem>>, %arg2: memref<5x128xf32, #tpu.memory_space<vmem>>, %arg3: memref<2x128xf32, #tpu.memory_space<vmem>>) attributes {dimension_semantics = [#tpu.dimension_semantics<parallel>], iteration_bounds = array<i64: 1>, scalar_prefetch = 0 : i64, scratch_operands = 0 : i64, tpu.core_type = #tpu.core_type<tc>, window_params = [{transform_indices = @transform_0, window_bounds = array<i64: 2, 4>}, {pipeline_mode = #tpu.pipeline_mode<synchronous>, transform_indices = @transform_1, window_bounds = array<i64: 5, 128>}, {transform_indices = @transform_2, window_bounds = array<i64: 2, 128>}]} {
    %c0 = arith.constant 0 : index
    %c0_0 = arith.constant 0 : index
    %0 = vector.load %arg1[%c0, %c0_0] : memref<2x4xf32, #tpu.memory_space<vmem>>, vector<2x1xf32>
    %c0_1 = arith.constant 0 : index
    %c0_2 = arith.constant 0 : index
    %1 = vector.load %arg2[%c0_1, %c0_2] : memref<5x128xf32, #tpu.memory_space<vmem>>, vector<1x128xf32>
    %2 = vector.broadcast %0 : vector<2x1xf32> to vector<2x128xf32>
    %3 = vector.broadcast %1 : vector<1x128xf32> to vector<2x128xf32>
    %4 = arith.mulf %2, %3 : vector<2x128xf32>
    %c4 = arith.constant 4 : index
    %c0_3 = arith.constant 0 : index
    %5 = vector.load %arg2[%c4, %c0_3] : memref<5x128xf32, #tpu.memory_space<vmem>>, vector<1x128xf32>
    %6 = vector.broadcast %5 : vector<1x128xf32> to vector<2x128xf32>
    %7 = arith.addf %4, %6 : vector<2x128xf32>
    %c0_4 = arith.constant 0 : index
    %c1 = arith.constant 1 : index
    %8 = vector.load %arg1[%c0_4, %c1] : memref<2x4xf32, #tpu.memory_space<vmem>>, vector<2x1xf32>
    %c1_5 = arith.constant 1 : index
    %c0_6 = arith.constant 0 : index
    %9 = vector.load %arg2[%c1_5, %c0_6] : memref<5x128xf32, #tpu.memory_space<vmem>>, vector<1x128xf32>
    %10 = vector.broadcast %8 : vector<2x1xf32> to vector<2x128xf32>
    %11 = vector.broadcast %9 : vector<1x128xf32> to vector<2x128xf32>
    %12 = arith.mulf %10, %11 : vector<2x128xf32>
    %13 = arith.addf %7, %12 : vector<2x128xf32>
    %c0_7 = arith.constant 0 : index
    %c2 = arith.constant 2 : index
    %14 = vector.load %arg1[%c0_7, %c2] : memref<2x4xf32, #tpu.memory_space<vmem>>, vector<2x1xf32>
    %c2_8 = arith.constant 2 : index
    %c0_9 = arith.constant 0 : index
    %15 = vector.load %arg2[%c2_8, %c0_9] : memref<5x128xf32, #tpu.memory_space<vmem>>, vector<1x128xf32>
    %16 = vector.broadcast %14 : vector<2x1xf32> to vector<2x128xf32>
    %17 = vector.broadcast %15 : vector<1x128xf32> to vector<2x128xf32>
    %18 = arith.mulf %16, %17 : vector<2x128xf32>
    %19 = arith.addf %13, %18 : vector<2x128xf32>
    %c0_10 = arith.constant 0 : index
    %c3 = arith.constant 3 : index
    %20 = vector.load %arg1[%c0_10, %c3] : memref<2x4xf32, #tpu.memory_space<vmem>>, vector<2x1xf32>
    %c3_11 = arith.constant 3 : index
    %c0_12 = arith.constant 0 : index
    %21 = vector.load %arg2[%c3_11, %c0_12] : memref<5x128xf32, #tpu.memory_space<vmem>>, vector<1x128xf32>
    %22 = vector.broadcast %20 : vector<2x1xf32> to vector<2x128xf32>
    %23 = vector.broadcast %21 : vector<1x128xf32> to vector<2x128xf32>
    %24 = arith.mulf %22, %23 : vector<2x128xf32>
    %25 = arith.addf %19, %24 : vector<2x128xf32>
    %cst = arith.constant 0.159154937 : f32
    %26 = vector.broadcast %cst : f32 to vector<2x128xf32>
    %27 = arith.mulf %25, %26 : vector<2x128xf32>
    %cst_13 = arith.constant 5.000000e-01 : f32
    %28 = vector.broadcast %cst_13 : f32 to vector<2x128xf32>
    %29 = arith.addf %27, %28 : vector<2x128xf32>
    %30 = math.floor %29 : vector<2x128xf32>
    %cst_14 = arith.constant 6.281250e+00 : f32
    %31 = vector.broadcast %cst_14 : f32 to vector<2x128xf32>
    %32 = arith.mulf %30, %31 : vector<2x128xf32>
    %33 = arith.subf %25, %32 : vector<2x128xf32>
    %cst_15 = arith.constant 0.00193530717 : f32
    %34 = vector.broadcast %cst_15 : f32 to vector<2x128xf32>
    %35 = arith.mulf %30, %34 : vector<2x128xf32>
    %36 = arith.subf %33, %35 : vector<2x128xf32>
    %37 = math.sin %36 : vector<2x128xf32>
    %c0_16 = arith.constant 0 : index
    %c0_17 = arith.constant 0 : index
    %38 = vector.load %arg3[%c0_16, %c0_17] : memref<2x128xf32, #tpu.memory_space<vmem>>, vector<2x128xf32>
    tpu.vector_store %arg3[%c0_16, %c0_17], %37 {strides = array<i32>} : memref<2x128xf32, #tpu.memory_space<vmem>>, vector<2x128xf32>,
    return
  }
  func.func @transform_0(%arg0: i32) -> (i32, i32) {
    %c0_i32 = arith.constant 0 : i32
    %c0_i32_0 = arith.constant 0 : i32
    return %arg0, %c0_i32 : i32, i32
  }
  func.func @transform_1(%arg0: i32) -> (i32, i32) {
    %c0_i32 = arith.constant 0 : i32
    %c0_i32_0 = arith.constant 0 : i32
    %c0_i32_1 = arith.constant 0 : i32
    return %c0_i32, %c0_i32_0 : i32, i32
  }
  func.func @transform_2(%arg0: i32) -> (i32, i32) {
    %c0_i32 = arith.constant 0 : i32
    %c0_i32_0 = arith.constant 0 : i32
    return %arg0, %c0_i32 : i32, i32
  }
}

</mosaic_0001>

<llo_original>
// kernel: tpu_custom_call.1
$region0: #{tpu_custom_call.1}
  #allocation0 [shape = 'u32[]', space=smem, size = 0x4, offset = 0x4, fixed_abs, tag = 'smem constant byte address 0x4 - core index']
  #allocation1 [shape = 'u32[144,128]{1,0:T(1,128)}', space=vmem, size = 0x12000, scoped, tag = 'internal scratch']
  %s0 = inlined_call_operand.hbm [shape: f32[2,4], index: 0, kind: input, shape index: {}]
  %s1 = inlined_call_operand.hbm [shape: f32[5,128], index: 1, kind: input, shape index: {}]
  %s2 = inlined_call_operand.hbm [shape: f32[2,128], index: 2, kind: output, shape index: {}]
  %s3 = sld [smem:[#allocation0]]
  $region26: #{tpu_custom_call.1} parent=0
    _
  %s5 = ssub.s32 1, %s3
  %s6 = scalar_select 0, %s5, %s3
  $region1: #{tpu_custom_call.1} parent=0
    #allocation2 [shape = 'u8[1024]{0}', space=vmem, size = 0x400, scoped, tag = 'input window, operand 0, single buffered']
    #allocation3 [shape = 's32[1]{0}', space=sflag, size = 0x4, scoped, tag = 'scoped memory for tpu_custom_call.1']
    #allocation4 [shape = 's32[1]{0}', space=sflag, size = 0x4, scoped, tag = 'scoped memory for tpu_custom_call.1']
    #allocation5 [shape = 'u8[4096]{0}', space=vmem, size = 0x1000, scoped, tag = 'input window, operand 1, single buffered']
    #allocation6 [shape = 's32[1]{0}', space=sflag, size = 0x4, scoped, tag = 'scoped memory for tpu_custom_call.1']
    #allocation7 [shape = 'u8[1024]{0}', space=vmem, size = 0x400, scoped, tag = 'output window, operand 0, single buffered']
    %7 = vsyncpa [#allocation3], 0
    %8 = vsyncpa [#allocation6], 0
    %9 = vsyncpa [#allocation4], 0
    // Predicated region
    $region2: #{tpu_custom_call.1} parent=1 // pred_check
      _
    $region3: #{tpu_custom_call.1} parent=1 // pred_check_branch
      %11 = sbr.rel (0) target = $region5
    $region4: #{tpu_custom_call.1} parent=1 // pred_region
      %s13 = ssub.s32 32, 32
      %14 = vsyncadd [#allocation3], %s13
      %s16 = sshll.u32 [#allocation2], 4
      %s17 = int_to_ptr.vmem [resolvable:$true] %s16
      %19 = dma.hbm_to_vmem [thread:$0]  %s0, 32, %s17, [#allocation3]
    $region5: #{tpu_custom_call.1} parent=1 // pred_fallthru
      _
    // Predicated region
    $region6: #{tpu_custom_call.1} parent=1 // pred_check
      _
    $region7: #{tpu_custom_call.1} parent=1 // pred_check_branch
      %21 = sbr.rel (0) target = $region9
    $region8: #{tpu_custom_call.1} parent=1 // pred_region
      %s23 = ssub.s32 128, 128
      %24 = vsyncadd [#allocation6], %s23
      %s26 = sshll.u32 [#allocation5], 4
      %s27 = int_to_ptr.vmem [resolvable:$true] %s26
      %29 = dma.hbm_to_vmem [thread:$0]  %s1, 128, %s27, [#allocation6]
    $region9: #{tpu_custom_call.1} parent=1 // pred_fallthru
      _
    // Predicated region
    $region10: #{tpu_custom_call.1} parent=1 // pred_check
      _
    $region11: #{tpu_custom_call.1} parent=1 // pred_check_branch
      %31 = sbr.rel (0) target = $region13
    $region12: #{tpu_custom_call.1} parent=1 // pred_region
      %32 = dma.done [#allocation3], 32
    $region13: #{tpu_custom_call.1} parent=1 // pred_fallthru
      _
    // Predicated region
    $region14: #{tpu_custom_call.1} parent=1 // pred_check
      _
    $region15: #{tpu_custom_call.1} parent=1 // pred_check_branch
      %34 = sbr.rel (0) target = $region17
    $region16: #{tpu_custom_call.1} parent=1 // pred_region
      %35 = dma.done [#allocation6], 128
    $region17: #{tpu_custom_call.1} parent=1 // pred_fallthru
      _
    %v36 = vld [vmem:[#allocation2] sm:$0x3]
    %v37 = vld [vmem:[#allocation5] sm:$0x1]
    %39 = vset.pattern.permute.xlu0 0
    %40 = vperm.xlu0 %39, %v36
    %v41 = vpop.permute.xlu0 %40
    %v43 = vlaneseq
    %v44 = vshrl.u32 %v43, 7
    %v45 = vsub.s32 0, %v44
    %v46 = vrot.slane %v37, %v45
    %v47 = vmul.f32 %v41, %v46
    %v48 = vld [vmem:[#allocation5 + $0x4] sm:$0x1]
    %v49 = vlaneseq
    %v50 = vshrl.u32 %v49, 7
    %v51 = vsub.s32 0, %v50
    %v52 = vrot.slane %v48, %v51
    %v53 = vadd.f32 %v47, %v52
    %v54 = vld [vmem:[#allocation5 + $0x1] sm:$0x1]
    %55 = vset.pattern.permute.xlu0 1
    %56 = vperm.xlu0 %55, %v36
    %v57 = vpop.permute.xlu0 %56
    %v59 = vlaneseq
    %v60 = vshrl.u32 %v59, 7
    %v61 = vsub.s32 0, %v60
    %v62 = vrot.slane %v54, %v61
    %v63 = vmul.f32 %v57, %v62
    %v64 = vadd.f32 %v53, %v63
    %v65 = vld [vmem:[#allocation5 + $0x2] sm:$0x1]
    %66 = vset.pattern.permute.xlu0 2
    %67 = vperm.xlu0 %66, %v36
    %v68 = vpop.permute.xlu0 %67
    %v70 = vlaneseq
    %v71 = vshrl.u32 %v70, 7
    %v72 = vsub.s32 0, %v71
    %v73 = vrot.slane %v65, %v72
    %v74 = vmul.f32 %v68, %v73
    %v75 = vadd.f32 %v64, %v74
    %v76 = vld [vmem:[#allocation5 + $0x3] sm:$0x1]
    %77 = vset.pattern.permute.xlu0 3
    %78 = vperm.xlu0 %77, %v36
    %v79 = vpop.permute.xlu0 %78
    %v81 = vlaneseq
    %v82 = vshrl.u32 %v81, 7
    %v83 = vsub.s32 0, %v82
    %v84 = vrot.slane %v76, %v83
    %v85 = vmul.f32 %v79, %v84
    %v86 = vadd.f32 %v75, %v85
    %v87 = vmul.f32 %v86, 0.15915494
    %v88 = vadd.f32 %v87, 0.5
    %v89 = vfloor.f32 %v88
    %v90 = vmul.f32 %v89, 6.28125
    %v91 = vsub.f32 %v86, %v90
    %v92 = vmul.f32 %v89, 0.0019353072
    %v93 = vsub.f32 %v91, %v92
    %v94 = vand.u32 2147483647, %v93
    %vm95 = vcmp.le.f32.partialorder %v94, 0.7853982
    %vm96 = vcmp.lt.s32.totalorder %v93, 0
    %v97 = vand.u32 %v93, 2139095040
    %v98 = vshrl.u32 %v97, 23
    %v99 = vsub.s32 %v98, 127
    %v100 = vand.u32 2147483647, %v93
    %v101 = vand.u32 %v100, 8388607
    %v102 = vor.u32 %v101, 8388608
    %v103 = vsub.s32 0, %v102
    %v104 = vadd.s32 %v99, 1
    %vm105 = vcmp.gt.s32.totalorder %v104, 0
    %v106 = vsel %vm105, %v104, 0
    %v107 = vshrl.u32 %v106, 5
    %v108 = vand.u32 %v106, 31
    %v109 = vsub.s32 32, %v108
    %v110 = vshrl.u32 683565275, %v109
    %v111 = vshll.u32 683565275, %v108
    %v112 = vshrl.u32 2475754826, %v109
    %v113 = vor.u32 %v111, %v112
    %v114 = vshll.u32 2475754826, %v108
    %v115 = vshrl.u32 2131351028, %v109
    %v116 = vor.u32 %v114, %v115
    %v117 = vshll.u32 2131351028, %v108
    %v118 = vshrl.u32 2102212464, %v109
    %v119 = vor.u32 %v117, %v118
    %v120 = vshll.u32 2102212464, %v108
    %v121 = vshrl.u32 920167782, %v109
    %v122 = vor.u32 %v120, %v121
    %v123 = vshll.u32 920167782, %v108
    %v124 = vshrl.u32 1326507024, %v109
    %v125 = vor.u32 %v123, %v124
    %vm126 = vcmp.lt.s32.totalorder %v107, 1
    %vm127 = vcmp.lt.s32.totalorder %v107, 2
    %vm128 = vcmp.lt.s32.totalorder %v107, 3
    %vm129 = vcmp.lt.s32.totalorder %v107, 4
    %v130 = vsel %vm126, %v110, %v113
    %v131 = vsel %vm129, %v119, 2102212464
    %v132 = vsel %vm128, %v116, %v131
    %v133 = vsel %vm127, %v130, %v132
    %v134 = vsel %vm126, %v113, %v116
    %v135 = vsel %vm129, %v122, 920167782
    %v136 = vsel %vm128, %v119, %v135
    %v137 = vsel %vm127, %v134, %v136
    %v138 = vsel %vm126, %v116, %v119
    %v139 = vsel %vm129, %v125, 1326507024
    %v140 = vsel %vm128, %v122, %v139
    %v141 = vsel %vm127, %v138, %v140
    %v142 = vshll.u32 %v102, 8
    %v143 = vmul.u32.u64.compose %v142, %v141
    %v144 = vextract.low.u32 %v143
    %v145 = vextract.high.u32 %v143
    %v146 = vmul.u32.u64.compose %v142, %v137
    %v147 = vextract.low.u32 %v146
    %v148 = vextract.high.u32 %v146
    %v149 = vmul.u32 %v142, %v133
    %v150 = vadd.s32 %v145, %v147
    %vm151 = vc.u32 %v145, %v147
    %v152 = vadd.s32 %v148, 1
    %v153 = vsel %vm151, %v152, %v148
    %v154 = vadd.s32 %v149, %v153
    %v155 = vadd.s32 %v154, 536870912
    %v156 = vshrl.u32 %v155, 30
    %v157 = vshll.u32 %v156, 30
    %v158 = vsub.s32 %v154, %v157
    %vm159 = vcmp.lt.s32.totalorder %v158, 0
    %v160 = vsub.s32 0, %v158
    %v161 = vsel %vm159, %v160, %v158
    %v162 = vclz %v161
    %v163 = vsub.s32 %v162, 2
    %vm164 = vcmp.gt.s32.totalorder 0, %v163
    %v165 = vsel %vm164, 0, %v163
    %v166 = vsub.s32 32, %v165
    %v167 = vshll.u32 %v158, %v165
    %v168 = vshrl.u32 %v150, %v166
    %v169 = vor.u32 %v167, %v168
    %v170 = vsub.s32 4294967266, %v165
    %v171 = vadd.s32 %v170, 127
    %v172 = vshll.u32 %v171, 23
    %v173 = vor.u32 4788187, %v172
    %v174 = vand.u32 2147483647, %v173
    %v176 = vcvt.s32.f32 %v169
    %v177 = vmul.f32 %v176, %v174
    %v178 = vxor.u32 %v177, 2147483648
    %v179 = vsel %vm96, %v178, %v177
    %v180 = vsub.s32 4, %v156
    %v181 = vsel %vm96, %v180, %v156
    %v182 = vsel %vm95, %v93, %v179
    %v183 = vsel %vm95, 0, %v181
    %v184 = vcosq.f32.pop %v182
    %v185 = vsinq.f32.pop %v182
    %vm186 = vweird.f32 %v93
    %v187 = vadd.s32 %v183, 3
    %v188 = vand.u32 %v187, 3
    %vm189 = vcmp.lt.s32.totalorder %v188, 2
    %vm190 = vcmp.eq.s32.totalorder %v188, 0
    %v191 = vxor.u32 %v185, 2147483648
    %v192 = vsel %vm190, %v184, %v191
    %vm193 = vcmp.eq.s32.totalorder %v188, 2
    %v194 = vxor.u32 %v184, 2147483648
    %v195 = vsel %vm193, %v194, %v185
    %v196 = vsel %vm189, %v192, %v195
    %v197 = vsel %vm186, nan, %v196
    %198 = vst [vmem:[#allocation7] sm:$0x3] %v197
    // Predicated region
    $region18: #{tpu_custom_call.1} parent=1 // pred_check
      _
    $region19: #{tpu_custom_call.1} parent=1 // pred_check_branch
      %200 = sbr.rel (0) target = $region21
    $region20: #{tpu_custom_call.1} parent=1 // pred_region
      %s202 = ssub.s32 32, 32
      %203 = vsyncadd [#allocation4], %s202
      %s205 = sshll.u32 [#allocation7], 4
      %s206 = int_to_ptr.vmem [resolvable:$true] %s205
      %208 = dma.vmem_to_hbm [thread:$0]  %s206, 32, %s2, [#allocation4]
    $region21: #{tpu_custom_call.1} parent=1 // pred_fallthru
      _
    // Predicated region
    $region22: #{tpu_custom_call.1} parent=1 // pred_check
      _
    $region23: #{tpu_custom_call.1} parent=1 // pred_check_branch
      %210 = sbr.rel (0) target = $region25
    $region24: #{tpu_custom_call.1} parent=1 // pred_region
      %211 = dma.done [#allocation4], 32
    $region25: #{tpu_custom_call.1} parent=1 // pred_fallthru
      _
    %212 = vsyncpa [#allocation3], 1
    %213 = vsyncpa [#allocation6], 1
    %214 = vsyncpa [#allocation4], 1

</llo_original>
